<compile_context>
chip_gen: v6e
topology: v6e:2x2x1
jax: 0.10.0
libtpu: 0.0.40
codegen_flags: <defaults>
</compile_context>

<pallas_src>
import functools

import jax
import jax.numpy as jnp
from jax.experimental import pallas as pl
from jax.experimental.pallas import tpu as pltpu


def _cdiv(a, b):
    return (a + b - 1) // b


def _round_up(x, m):
    return ((x + m - 1) // m) * m


def _vmem_capacity_bytes():
    try:
        info = pltpu.get_tpu_info()
        cap = int(getattr(info, "vmem_capacity_bytes", 0) or 0)
        if cap > 0:
            return cap
    except Exception:
        pass
    return 64 << 20  # conservative default (v7x per-TensorCore VMEM)


# --------------------------------------------------------------------------
# Kernels
# --------------------------------------------------------------------------
def _lanechunk_kernel(x_ref, o_ref, *, rv_num, hdim, inv_two_rv):
    # x_ref: [TB, rv_num*hdim]  (batch on sublanes, (rv, hdim) flattened on lanes)
    # Stream over rv with static, 128-aligned lane-chunk slices; only two
    # [TB, hdim] f32 values stay live -> minimal vreg pressure, zero relayout.
    x0 = x_ref[:, 0:hdim].astype(jnp.float32)
    s = x0
    sq = x0 * x0
    for r in range(1, rv_num):
        xr = x_ref[:, r * hdim:(r + 1) * hdim].astype(jnp.float32)
        s = s + xr
        sq = sq + xr * xr
    o_ref[...] = ((s * s - sq) * inv_two_rv).astype(o_ref.dtype)


def _rv_tiled_kernel(x_ref, o_ref, s_acc, sq_acc, *,
                     rv_num, block_rv, inv_two_rv, needs_mask):
    # x_ref: [TB, TR, H]; rv is the last ("arbitrary") grid axis.
    r_id = pl.program_id(1)

    @pl.when(r_id == 0)
    def _():
        s_acc[...] = jnp.zeros_like(s_acc)
        sq_acc[...] = jnp.zeros_like(sq_acc)

    x = x_ref[...].astype(jnp.float32)
    if needs_mask:
        # Zero out-of-range rv rows of the ragged last block.
        rv_idx = jax.lax.broadcasted_iota(jnp.int32, (block_rv, x.shape[-1]), 0)
        valid = (rv_idx + r_id * block_rv) < rv_num
        x = jnp.where(valid[None, :, :], x, 0.0)

    s_acc[...] += jnp.sum(x, axis=1)       # XLU sublane reduce
    sq_acc[...] += jnp.sum(x * x, axis=1)  # VPU mul + XLU reduce

    @pl.when(r_id == pl.num_programs(1) - 1)
    def _():
        s = s_acc[...]
        o_ref[...] = ((s * s - sq_acc[...]) * inv_two_rv).astype(o_ref.dtype)


# --------------------------------------------------------------------------
# Wrapper
# --------------------------------------------------------------------------
def pairwise_aggre(inputs, *, block_bz=None, block_rv=None):
    """inputs: [bz, rv_num, hdim] (f32 or bf16). Returns [bz, hdim], same dtype."""
    bz, rv_num, hdim = inputs.shape
    out_dtype = inputs.dtype
    itemsize = jnp.dtype(inputs.dtype).itemsize
    out_itemsize = jnp.dtype(out_dtype).itemsize
    # bf16 packs 16 rows per sublane tile -> keep output sublane dim 16-aligned.
    row_align = 16 if out_itemsize < 4 else 8

    vmem_cap = _vmem_capacity_bytes()
    # Per-input-tile byte budget; double buffer + accumulators must fit VMEM.
    tile_budget = max(4 << 20, min(16 << 20, vmem_cap // 6))

    row_bytes = max(rv_num * hdim * itemsize, 1)
    inv_two_rv = float(1.0 / (rv_num * 2.0))

    use_lanechunk = (
        block_rv is None
        and hdim % 128 == 0
        and rv_num <= 128
        and row_align * row_bytes <= tile_budget
    )

    # ---- batch tile: purely byte-based (no artificial row cap) -------------
    if block_bz is None:
        if row_align * row_bytes <= tile_budget:
            tb = tile_budget // row_bytes
        else:
            tb = row_align  # huge rows: minimal batch tile, tile over rv instead
        tb = max(row_align, (tb // row_align) * row_align)
        tb = min(tb, 4096)
        tb = min(tb, _round_up(bz, row_align))
        if bz >= 2 * row_align:
            # Keep >= 2 grid steps along batch so both v7x TensorCores get work.
            tb = min(tb, _round_up(_cdiv(bz, 2), row_align))
        block_bz = tb
    block_bz = max(row_align, _round_up(block_bz, row_align))
    grid_b = _cdiv(bz, block_bz)

    flops = 3 * bz * rv_num * hdim + 3 * bz * hdim
    bytes_accessed = bz * rv_num * hdim * itemsize + bz * hdim * out_itemsize
    cost = pl.CostEstimate(flops=flops, transcendentals=0,
                           bytes_accessed=bytes_accessed)

    if use_lanechunk:
        # Free reshape (merges trailing contiguous dims); batch lands densely
        # on sublanes, result is already in the output's sublane x lane layout.
        x2d = inputs.reshape(bz, rv_num * hdim)
        kernel = functools.partial(
            _lanechunk_kernel, rv_num=rv_num, hdim=hdim, inv_two_rv=inv_two_rv)

        in_tile = block_bz * rv_num * hdim * itemsize
        out_tile = block_bz * hdim * out_itemsize
        needed = 2 * (in_tile + out_tile) + (8 << 20)
        vmem_limit = int(min(int(vmem_cap * 0.9), max(needed, 32 << 20)))

        return pl.pallas_call(
            kernel,
            out_shape=jax.ShapeDtypeStruct((bz, hdim), out_dtype),
            grid=(grid_b,),
            in_specs=[pl.BlockSpec((block_bz, rv_num * hdim), lambda i: (i, 0))],
            out_specs=pl.BlockSpec((block_bz, hdim), lambda i: (i, 0)),
            compiler_params=pltpu.CompilerParams(
                dimension_semantics=("parallel",),
                vmem_limit_bytes=vmem_limit,
            ),
            cost_estimate=cost,
        )(x2d)

    # ---- general 3-D path: tile over rv with f32 accumulators --------------
    if block_rv is None:
        per_rv_bytes = block_bz * hdim * itemsize
        tr = tile_budget // max(per_rv_bytes, 1)
        tr = max(8, (tr // 8) * 8)
        block_rv = rv_num if tr >= rv_num else tr
    if block_rv >= rv_num:
        block_rv = rv_num                      # full dim: always legal
    else:
        block_rv = max(8, (block_rv // 8) * 8)  # partial block must be 8-aligned
    grid_r = _cdiv(rv_num, block_rv)
    needs_mask = (rv_num % block_rv) != 0

    kernel = functools.partial(
        _rv_tiled_kernel, rv_num=rv_num, block_rv=block_rv,
        inv_two_rv=inv_two_rv, needs_mask=needs_mask)

    in_tile = block_bz * block_rv * hdim * itemsize
    out_tile = block_bz * hdim * out_itemsize
    scratch_bytes = 2 * block_bz * hdim * 4
    needed = 2 * (in_tile + out_tile) + scratch_bytes + (8 << 20)
    vmem_limit = int(min(int(vmem_cap * 0.9), max(needed, 32 << 20)))

    return pl.pallas_call(
        kernel,
        out_shape=jax.ShapeDtypeStruct((bz, hdim), out_dtype),
        grid=(grid_b, grid_r),
        in_specs=[pl.BlockSpec((block_bz, block_rv, hdim),
                               lambda i, r: (i, r, 0))],
        out_specs=pl.BlockSpec((block_bz, hdim), lambda i, r: (i, 0)),
        scratch_shapes=[pltpu.VMEM((block_bz, hdim), jnp.float32),
                        pltpu.VMEM((block_bz, hdim), jnp.float32)],
        compiler_params=pltpu.CompilerParams(
            dimension_semantics=("parallel", "arbitrary"),
            vmem_limit_bytes=vmem_limit,
        ),
        cost_estimate=cost,
    )(inputs)


def pairwise_aggre_reference(inputs):
    bz, rv_num, hdim = inputs.shape
    x = inputs.astype(jnp.float32)
    s = jnp.sum(x, axis=1)
    term_1 = s * s
    term_2 = jnp.sum(x * x, axis=1)
    return ((term_1 - term_2) / (rv_num * 2.0)).astype(inputs.dtype)


if __name__ == "__main__":
    key = jax.random.PRNGKey(0)
    k1, k2, k3, k4, k5 = jax.random.split(key, 5)

    # 1) Spec shape: hdim not lane-aligned -> 3-D sublane-reduce path (grid_r=1).
    x1 = jax.random.normal(k1, (2, 4, 32), jnp.float32)
    o1 = jax.block_until_ready(pairwise_aggre(x1))
    r1 = pairwise_aggre_reference(x1)
    assert o1.shape == (2, 32), o1.shape
    assert jnp.allclose(o1, r1, atol=1e-4, rtol=1e-4)

    # 2) Lane-aligned hdim -> 2-D lane-chunk streaming fast path.
    x2 = jax.random.normal(k2, (16, 4, 128), jnp.float32)
    o2 = jax.block_until_ready(pairwise_aggre(x2))
    r2 = pairwise_aggre_reference(x2)
    assert jnp.allclose(o2, r2, atol=1e-4, rtol=1e-4)

    # 3) Forced rv-tiled path, rv divisible by block_rv (no mask).
    x3 = jax.random.normal(k3, (8, 24, 128), jnp.float32)
    o3 = jax.block_until_ready(pairwise_aggre(x3, block_bz=8, block_rv=8))
    r3 = pairwise_aggre_reference(x3)
    assert jnp.allclose(o3, r3, atol=1e-4, rtol=1e-4)

    # 4) Forced rv-tiled path with a ragged rv tail (masked).
    x4 = jax.random.normal(k4, (8, 20, 128), jnp.float32)
    o4 = jax.block_until_ready(pairwise_aggre(x4, block_bz=8, block_rv=8))
    r4 = pairwise_aggre_reference(x4)
    assert jnp.allclose(o4, r4, atol=1e-4, rtol=1e-4)

    # 5) bf16 input on the fast path (16-row alignment branch).
    x5 = jax.random.normal(k5, (16, 4, 128), jnp.bfloat16)
    o5 = jax.block_until_ready(pairwise_aggre(x5))
    r5 = pairwise_aggre_reference(x5)
    assert jnp.allclose(o5.astype(jnp.float32), r5.astype(jnp.float32),
                        atol=0.05, rtol=0.05)

    print("KERNEL_OK")
</pallas_src>

<mosaic_0001>
module attributes {stable_mosaic.version = 11 : i64} {
  func.func @_rv_tiled_kernel(%arg0: i32, %arg1: i32, %arg2: memref<8x4x32xf32, #tpu.memory_space<vmem>>, %arg3: memref<8x32xf32, #tpu.memory_space<vmem>>, %arg4: memref<8x32xf32, #tpu.memory_space<vmem>>, %arg5: memref<8x32xf32, #tpu.memory_space<vmem>>) attributes {dimension_semantics = [#tpu.dimension_semantics<parallel>, #tpu.dimension_semantics<arbitrary>], iteration_bounds = array<i64: 1, 1>, scalar_prefetch = 0 : i64, scratch_operands = 2 : i64, tpu.core_type = #tpu.core_type<tc>, window_params = [{transform_indices = @transform_0, window_bounds = array<i64: 8, 4, 32>}, {transform_indices = @transform_1, window_bounds = array<i64: 8, 32>}]} {
    %c0_i32 = arith.constant 0 : i32
    %0 = arith.cmpi eq, %arg1, %c0_i32 : i32
    %1 = arith.extui %0 : i1 to i32
    %c0_i32_0 = arith.constant 0 : i32
    %2 = arith.cmpi ne, %1, %c0_i32_0 : i32
    scf.if %2 {
      %cst_14 = arith.constant 0.000000e+00 : f32
      %16 = vector.broadcast %cst_14 : f32 to vector<8x32xf32>
      %c0_15 = arith.constant 0 : index
      %c0_16 = arith.constant 0 : index
      %17 = vector.load %arg4[%c0_15, %c0_16] : memref<8x32xf32, #tpu.memory_space<vmem>>, vector<8x32xf32>
      tpu.vector_store %arg4[%c0_15, %c0_16], %16 {strides = array<i32>} : memref<8x32xf32, #tpu.memory_space<vmem>>, vector<8x32xf32>,
      %cst_17 = arith.constant 0.000000e+00 : f32
      %18 = vector.broadcast %cst_17 : f32 to vector<8x32xf32>
      %c0_18 = arith.constant 0 : index
      %c0_19 = arith.constant 0 : index
      %19 = vector.load %arg5[%c0_18, %c0_19] : memref<8x32xf32, #tpu.memory_space<vmem>>, vector<8x32xf32>
      tpu.vector_store %arg5[%c0_18, %c0_19], %18 {strides = array<i32>} : memref<8x32xf32, #tpu.memory_space<vmem>>, vector<8x32xf32>,
    } else {
    }
    %c0 = arith.constant 0 : index
    %c0_1 = arith.constant 0 : index
    %c0_2 = arith.constant 0 : index
    %3 = vector.load %arg2[%c0, %c0_1, %c0_2] : memref<8x4x32xf32, #tpu.memory_space<vmem>>, vector<8x4x32xf32>
    %c0_3 = arith.constant 0 : index
    %c0_4 = arith.constant 0 : index
    %4 = vector.load %arg4[%c0_3, %c0_4] : memref<8x32xf32, #tpu.memory_space<vmem>>, vector<8x32xf32>
    %cst = arith.constant dense<0.000000e+00> : vector<8x32xf32>
    %5 = vector.multi_reduction <add>, %3, %cst [1] : vector<8x4x32xf32> to vector<8x32xf32>
    %6 = arith.addf %4, %5 : vector<8x32xf32>
    %c0_5 = arith.constant 0 : index
    %c0_6 = arith.constant 0 : index
    %7 = vector.load %arg4[%c0_5, %c0_6] : memref<8x32xf32, #tpu.memory_space<vmem>>, vector<8x32xf32>
    tpu.vector_store %arg4[%c0_5, %c0_6], %6 {strides = array<i32>} : memref<8x32xf32, #tpu.memory_space<vmem>>, vector<8x32xf32>,
    %c0_7 = arith.constant 0 : index
    %c0_8 = arith.constant 0 : index
    %8 = vector.load %arg5[%c0_7, %c0_8] : memref<8x32xf32, #tpu.memory_space<vmem>>, vector<8x32xf32>
    %9 = arith.mulf %3, %3 : vector<8x4x32xf32>
    %cst_9 = arith.constant dense<0.000000e+00> : vector<8x32xf32>
    %10 = vector.multi_reduction <add>, %9, %cst_9 [1] : vector<8x4x32xf32> to vector<8x32xf32>
    %11 = arith.addf %8, %10 : vector<8x32xf32>
    %c0_10 = arith.constant 0 : index
    %c0_11 = arith.constant 0 : index
    %12 = vector.load %arg5[%c0_10, %c0_11] : memref<8x32xf32, #tpu.memory_space<vmem>>, vector<8x32xf32>
    tpu.vector_store %arg5[%c0_10, %c0_11], %11 {strides = array<i32>} : memref<8x32xf32, #tpu.memory_space<vmem>>, vector<8x32xf32>,
    %c0_i32_12 = arith.constant 0 : i32
    %13 = arith.cmpi eq, %arg1, %c0_i32_12 : i32
    %14 = arith.extui %13 : i1 to i32
    %c0_i32_13 = arith.constant 0 : i32
    %15 = arith.cmpi ne, %14, %c0_i32_13 : i32
    scf.if %15 {
      %c0_14 = arith.constant 0 : index
      %c0_15 = arith.constant 0 : index
      %16 = vector.load %arg4[%c0_14, %c0_15] : memref<8x32xf32, #tpu.memory_space<vmem>>, vector<8x32xf32>
      %17 = arith.mulf %16, %16 : vector<8x32xf32>
      %c0_16 = arith.constant 0 : index
      %c0_17 = arith.constant 0 : index
      %18 = vector.load %arg5[%c0_16, %c0_17] : memref<8x32xf32, #tpu.memory_space<vmem>>, vector<8x32xf32>
      %19 = arith.subf %17, %18 : vector<8x32xf32>
      %cst_18 = arith.constant 1.250000e-01 : f32
      %20 = vector.broadcast %cst_18 : f32 to vector<8x32xf32>
      %21 = arith.mulf %19, %20 : vector<8x32xf32>
      %c0_19 = arith.constant 0 : index
      %c0_20 = arith.constant 0 : index
      %22 = vector.load %arg3[%c0_19, %c0_20] : memref<8x32xf32, #tpu.memory_space<vmem>>, vector<8x32xf32>
      tpu.vector_store %arg3[%c0_19, %c0_20], %21 {strides = array<i32>} : memref<8x32xf32, #tpu.memory_space<vmem>>, vector<8x32xf32>,
    } else {
    }
    return
  }
  func.func @transform_0(%arg0: i32, %arg1: i32) -> (i32, i32, i32) {
    %c0_i32 = arith.constant 0 : i32
    %c0_i32_0 = arith.constant 0 : i32
    return %arg0, %arg1, %c0_i32 : i32, i32, i32
  }
  func.func @transform_1(%arg0: i32, %arg1: i32) -> (i32, i32) {
    %c0_i32 = arith.constant 0 : i32
    %c0_i32_0 = arith.constant 0 : i32
    return %arg0, %c0_i32 : i32, i32
  }
}

</mosaic_0001>

<llo_original>
// kernel: tpu_custom_call.1
$region0: #{tpu_custom_call.1}
  #allocation0 [shape = 'u32[]', space=smem, size = 0x4, offset = 0x4, fixed_abs, tag = 'smem constant byte address 0x4 - core index']
  #allocation1 [shape = 'u32[144,128]{1,0:T(1,128)}', space=vmem, size = 0x12000, scoped, tag = 'internal scratch']
  #allocation2 [shape = 'f32[8,32]{1,0:T(8,128)}', space=vmem, size = 0x1000, scoped, tag = 'scratch operand']
  #allocation3 [shape = 'f32[8,32]{1,0:T(8,128)}', space=vmem, size = 0x1000, scoped, tag = 'scratch operand']
  %s0 = inlined_call_operand.hbm [shape: f32[2,4,32], index: 0, kind: input, shape index: {}]
  %s1 = inlined_call_operand.hbm [shape: f32[2,32], index: 1, kind: output, shape index: {}]
  %s2 = sld [smem:[#allocation0]]
  $region26: #{tpu_custom_call.1} parent=0
    _
  %s4 = ssub.s32 1, %s2
  %s5 = scalar_select 0, %s4, %s2
  $region1: #{tpu_custom_call.1} parent=0
    #allocation4 [shape = 'u8[16384]{0}', space=vmem, size = 0x4000, scoped, tag = 'input window, operand 0, single buffered']
    #allocation5 [shape = 's32[1]{0}', space=sflag, size = 0x4, scoped, tag = 'scoped memory for tpu_custom_call.1']
    #allocation6 [shape = 's32[1]{0}', space=sflag, size = 0x4, scoped, tag = 'scoped memory for tpu_custom_call.1']
    #allocation7 [shape = 'u8[4096]{0}', space=vmem, size = 0x1000, scoped, tag = 'output window, operand 0, single buffered']
    %6 = vsyncpa [#allocation5], 0
    %7 = vsyncpa [#allocation6], 0
    // Predicated region
    $region2: #{tpu_custom_call.1} parent=1 // pred_check
      _
    $region3: #{tpu_custom_call.1} parent=1 // pred_check_branch
      %9 = sbr.rel (0) target = $region5
    $region4: #{tpu_custom_call.1} parent=1 // pred_region
      %s11 = ssub.s32 512, 128
      %12 = vsyncadd [#allocation5], %s11
      %s13 = sshll.u32 [#allocation4], 4
      %s14 = int_to_ptr.vmem [resolvable:$true] %s13
      %19 = dma.hbm_to_vmem [thread:$0]  %s0, 128, %s14, [#allocation5], 64, 64, 4
    $region5: #{tpu_custom_call.1} parent=1 // pred_fallthru
      _
    // Predicated region
    $region6: #{tpu_custom_call.1} parent=1 // pred_check
      _
    $region7: #{tpu_custom_call.1} parent=1 // pred_check_branch
      %21 = sbr.rel (0) target = $region9
    $region8: #{tpu_custom_call.1} parent=1 // pred_region
      %22 = dma.done [#allocation5], 512
    $region9: #{tpu_custom_call.1} parent=1 // pred_fallthru
      _
    %p23 = scmp.eq.s32.totalorder 0, 0
    // Predicated region
    $region10: #{tpu_custom_call.1} parent=1 // pred_check
      %p24 = pneg %p23
    $region11: #{tpu_custom_call.1} parent=1 // pred_check_branch
      %26 = sbr.rel (%p24) target = $region13
    $region12: #{tpu_custom_call.1} parent=1 // pred_region
      %vm27 = vcmask 261120
      %28 = vst.msk [vmem:[#allocation2] sm:$0xff] %vm27, 0.0
      %29 = vst.msk [vmem:[#allocation3] sm:$0xff] %vm27, 0.0
    $region13: #{tpu_custom_call.1} parent=1 // pred_fallthru
      _
    %v30 = vld [vmem:[#allocation4] sm:$0xf]
    %v31 = vld [vmem:[#allocation4 + $0x4] sm:$0xf]
    %v32 = vld [vmem:[#allocation4 + $0x8] sm:$0xf]
    %v33 = vld [vmem:[#allocation4 + $0xc] sm:$0xf]
    %v34 = vld [vmem:[#allocation4 + $0x10] sm:$0xf]
    %v35 = vld [vmem:[#allocation4 + $0x14] sm:$0xf]
    %v36 = vld [vmem:[#allocation4 + $0x18] sm:$0xf]
    %v37 = vld [vmem:[#allocation4 + $0x1c] sm:$0xf]
    %v38 = vld [vmem:[#allocation2] sm:$0xff]
    %vm39 = vcmask 257024
    %v40 = vsel %vm39, %v30, 0.0
    %v41 = vrot.slane %v40, 4
    %v42 = vadd.f32 %v40, %v41
    %v43 = vrot.slane %v42, 2
    %v44 = vadd.f32 %v42, %v43
    %v45 = vrot.slane %v44, 1
    %v46 = vadd.f32 %v44, %v45
    %v47 = vsel %vm39, %v31, 0.0
    %v48 = vrot.slane %v47, 4
    %v49 = vadd.f32 %v47, %v48
    %v50 = vrot.slane %v49, 2
    %v51 = vadd.f32 %v49, %v50
    %v52 = vrot.slane %v51, 1
    %v53 = vadd.f32 %v51, %v52
    %v54 = vsel %vm39, %v32, 0.0
    %v55 = vrot.slane %v54, 4
    %v56 = vadd.f32 %v54, %v55
    %v57 = vrot.slane %v56, 2
    %v58 = vadd.f32 %v56, %v57
    %v59 = vrot.slane %v58, 1
    %v60 = vadd.f32 %v58, %v59
    %v61 = vsel %vm39, %v33, 0.0
    %v62 = vrot.slane %v61, 4
    %v63 = vadd.f32 %v61, %v62
    %v64 = vrot.slane %v63, 2
    %v65 = vadd.f32 %v63, %v64
    %v66 = vrot.slane %v65, 1
    %v67 = vadd.f32 %v65, %v66
    %v68 = vsel %vm39, %v34, 0.0
    %v69 = vrot.slane %v68, 4
    %v70 = vadd.f32 %v68, %v69
    %v71 = vrot.slane %v70, 2
    %v72 = vadd.f32 %v70, %v71
    %v73 = vrot.slane %v72, 1
    %v74 = vadd.f32 %v72, %v73
    %v75 = vsel %vm39, %v35, 0.0
    %v76 = vrot.slane %v75, 4
    %v77 = vadd.f32 %v75, %v76
    %v78 = vrot.slane %v77, 2
    %v79 = vadd.f32 %v77, %v78
    %v80 = vrot.slane %v79, 1
    %v81 = vadd.f32 %v79, %v80
    %v82 = vsel %vm39, %v36, 0.0
    %v83 = vrot.slane %v82, 4
    %v84 = vadd.f32 %v82, %v83
    %v85 = vrot.slane %v84, 2
    %v86 = vadd.f32 %v84, %v85
    %v87 = vrot.slane %v86, 1
    %v88 = vadd.f32 %v86, %v87
    %v89 = vsel %vm39, %v37, 0.0
    %v90 = vrot.slane %v89, 4
    %v91 = vadd.f32 %v89, %v90
    %v92 = vrot.slane %v91, 2
    %v93 = vadd.f32 %v91, %v92
    %v94 = vrot.slane %v93, 1
    %v95 = vadd.f32 %v93, %v94
    %vm104 = vcmask 1041409
    %v105 = vsel %vm104, %v53, %v46
    %vm106 = vcmask 1042434
    %v107 = vsel %vm106, %v60, %v105
    %vm108 = vcmask 1043459
    %v109 = vsel %vm108, %v67, %v107
    %vm110 = vcmask 1044484
    %v111 = vsel %vm110, %v74, %v109
    %vm112 = vcmask 1045509
    %v113 = vsel %vm112, %v81, %v111
    %vm114 = vcmask 1046534
    %v115 = vsel %vm114, %v88, %v113
    %vm116 = vcmask 1047559
    %v117 = vsel %vm116, %v95, %v115
    %v119 = vadd.f32 %v38, %v117
    %vm120 = vcmask 261120
    %121 = vst.msk [vmem:[#allocation2] sm:$0xff] %vm120, %v119
    %v122 = vld [vmem:[#allocation3] sm:$0xff]
    %v123 = vmul.f32 %v30, %v30
    %v124 = vmul.f32 %v31, %v31
    %v125 = vmul.f32 %v32, %v32
    %v126 = vmul.f32 %v33, %v33
    %v127 = vmul.f32 %v34, %v34
    %v128 = vmul.f32 %v35, %v35
    %v129 = vmul.f32 %v36, %v36
    %v130 = vmul.f32 %v37, %v37
    %v131 = vsel %vm39, %v123, 0.0
    %v132 = vrot.slane %v131, 4
    %v133 = vadd.f32 %v131, %v132
    %v134 = vrot.slane %v133, 2
    %v135 = vadd.f32 %v133, %v134
    %v136 = vrot.slane %v135, 1
    %v137 = vadd.f32 %v135, %v136
    %v138 = vsel %vm39, %v124, 0.0
    %v139 = vrot.slane %v138, 4
    %v140 = vadd.f32 %v138, %v139
    %v141 = vrot.slane %v140, 2
    %v142 = vadd.f32 %v140, %v141
    %v143 = vrot.slane %v142, 1
    %v144 = vadd.f32 %v142, %v143
    %v145 = vsel %vm39, %v125, 0.0
    %v146 = vrot.slane %v145, 4
    %v147 = vadd.f32 %v145, %v146
    %v148 = vrot.slane %v147, 2
    %v149 = vadd.f32 %v147, %v148
    %v150 = vrot.slane %v149, 1
    %v151 = vadd.f32 %v149, %v150
    %v152 = vsel %vm39, %v126, 0.0
    %v153 = vrot.slane %v152, 4
    %v154 = vadd.f32 %v152, %v153
    %v155 = vrot.slane %v154, 2
    %v156 = vadd.f32 %v154, %v155
    %v157 = vrot.slane %v156, 1
    %v158 = vadd.f32 %v156, %v157
    %v159 = vsel %vm39, %v127, 0.0
    %v160 = vrot.slane %v159, 4
    %v161 = vadd.f32 %v159, %v160
    %v162 = vrot.slane %v161, 2
    %v163 = vadd.f32 %v161, %v162
    %v164 = vrot.slane %v163, 1
    %v165 = vadd.f32 %v163, %v164
    %v166 = vsel %vm39, %v128, 0.0
    %v167 = vrot.slane %v166, 4
    %v168 = vadd.f32 %v166, %v167
    %v169 = vrot.slane %v168, 2
    %v170 = vadd.f32 %v168, %v169
    %v171 = vrot.slane %v170, 1
    %v172 = vadd.f32 %v170, %v171
    %v173 = vsel %vm39, %v129, 0.0
    %v174 = vrot.slane %v173, 4
    %v175 = vadd.f32 %v173, %v174
    %v176 = vrot.slane %v175, 2
    %v177 = vadd.f32 %v175, %v176
    %v178 = vrot.slane %v177, 1
    %v179 = vadd.f32 %v177, %v178
    %v180 = vsel %vm39, %v130, 0.0
    %v181 = vrot.slane %v180, 4
    %v182 = vadd.f32 %v180, %v181
    %v183 = vrot.slane %v182, 2
    %v184 = vadd.f32 %v182, %v183
    %v185 = vrot.slane %v184, 1
    %v186 = vadd.f32 %v184, %v185
    %v195 = vsel %vm104, %v144, %v137
    %v196 = vsel %vm106, %v151, %v195
    %v197 = vsel %vm108, %v158, %v196
    %v198 = vsel %vm110, %v165, %v197
    %v199 = vsel %vm112, %v172, %v198
    %v200 = vsel %vm114, %v179, %v199
    %v201 = vsel %vm116, %v186, %v200
    %v203 = vadd.f32 %v122, %v201
    %204 = vst.msk [vmem:[#allocation3] sm:$0xff] %vm120, %v203
    // Predicated region
    $region14: #{tpu_custom_call.1} parent=1 // pred_check
      %p205 = pneg %p23
    $region15: #{tpu_custom_call.1} parent=1 // pred_check_branch
      %207 = sbr.rel (%p205) target = $region17
    $region16: #{tpu_custom_call.1} parent=1 // pred_region
      %v208 = vld [vmem:[#allocation2] sm:$0xff]
      %v209 = vmul.f32 %v208, %v208
      %v210 = vld [vmem:[#allocation3] sm:$0xff]
      %v211 = vsub.f32 %v209, %v210
      %v212 = vmul.f32 %v211, 0.125
      %213 = vst.msk [vmem:[#allocation7] sm:$0xff] %vm120, %v212
    $region17: #{tpu_custom_call.1} parent=1 // pred_fallthru
      _
    // Predicated region
    $region18: #{tpu_custom_call.1} parent=1 // pred_check
      _
    $region19: #{tpu_custom_call.1} parent=1 // pred_check_branch
      %215 = sbr.rel (0) target = $region21
    $region20: #{tpu_custom_call.1} parent=1 // pred_region
      %s217 = ssub.s32 128, 32
      %218 = vsyncadd [#allocation6], %s217
      %s219 = sshll.u32 [#allocation7], 4
      %s220 = int_to_ptr.vmem [resolvable:$true] %s219
      %225 = dma.vmem_to_hbm [thread:$0]  %s220, 32, %s1, [#allocation6], 32, 32, 2
    $region21: #{tpu_custom_call.1} parent=1 // pred_fallthru
      _
    // Predicated region
    $region22: #{tpu_custom_call.1} parent=1 // pred_check
      _
    $region23: #{tpu_custom_call.1} parent=1 // pred_check_branch
      %227 = sbr.rel (0) target = $region25
    $region24: #{tpu_custom_call.1} parent=1 // pred_region
      %228 = dma.done [#allocation6], 128
    $region25: #{tpu_custom_call.1} parent=1 // pred_fallthru
      _
    %229 = vsyncpa [#allocation5], 1
    %230 = vsyncpa [#allocation6], 1

</llo_original>
